<compile_context>
chip_gen: v7x
topology: tpu7x:2x2x1
jax: 0.10.0
libtpu: 0.0.40
codegen_flags: <defaults>
</compile_context>

<pallas_src>
import functools

import jax
import jax.numpy as jnp
from jax import lax
from jax.experimental import pallas as pl
from jax.experimental.pallas import tpu as pltpu


# ----------------------------------------------------------------------------
# Kernel 1: tiled GroupNorm statistics -> per-channel scale/shift
# ----------------------------------------------------------------------------
def _group_stats_kernel(x_ref, gamma_ref, beta_ref, cg_ref, gc_ref, o_ref,
                        acc_ref, *, eps, inv_n):
    """Per-(batch, HW-tile) partial sums, finalized on the last tile.

    Group reduce/broadcast via small (C, G)/(G, C) one-hot matmuls; emits
    per-channel scale/shift so later kernels normalize a tile with a single
    FMA: h = x * scale + shift.
    """
    i = pl.program_id(1)

    @pl.when(i == 0)
    def _():
        acc_ref[...] = jnp.zeros_like(acc_ref)

    x = x_ref[0]                                                # (T, C) f32
    s1 = jnp.sum(x, axis=0, keepdims=True)                      # (1, C)
    s2 = jnp.sum(x * x, axis=0, keepdims=True)                  # (1, C)
    acc_ref[...] += jnp.concatenate([s1, s2], axis=0)           # (2, C)

    @pl.when(i == pl.num_programs(1) - 1)
    def _():
        sums = acc_ref[...]
        gmean = jnp.dot(sums[0:1, :], cg_ref[...],
                        preferred_element_type=jnp.float32) * inv_n      # (1, G)
        gmsq = jnp.dot(sums[1:2, :], cg_ref[...],
                       preferred_element_type=jnp.float32) * inv_n       # (1, G)
        # TODO(synk): one-pass E[x^2]-mean^2; switch to a two-pass/Welford
        # variant if activations ever have |mean| >> std.
        gvar = jnp.maximum(gmsq - gmean * gmean, 0.0)
        rstd_c = jnp.dot(lax.rsqrt(gvar + eps), gc_ref[...],
                         preferred_element_type=jnp.float32)             # (1, C)
        mean_c = jnp.dot(gmean, gc_ref[...],
                         preferred_element_type=jnp.float32)             # (1, C)
        scale = gamma_ref[...] * rstd_c
        shift = beta_ref[...] - mean_c * scale
        o_ref[0] = jnp.concatenate([scale, shift], axis=0)               # (2, C)


# ----------------------------------------------------------------------------
# Kernel 2: fused normalize + K/V projection (K written pre-transposed)
# ----------------------------------------------------------------------------
def _kv_proj_kernel(ss_ref, x_ref, wkv_ref, bkv_ref, kt_ref, v_ref, *, c):
    ss = ss_ref[0]                        # (2, C) scale/shift from kernel 1
    scale = ss[0:1, :]
    shift = ss[1:2, :]
    h = x_ref[0] * scale + shift                                          # (T, C)
    kv = jnp.dot(h.astype(jnp.bfloat16), wkv_ref[...],
                 preferred_element_type=jnp.float32) + bkv_ref[...]       # (T, 2C)
    # Pay the K transpose once here (per K tile) instead of per (qi, ki) step.
    kt_ref[0] = kv[:, :c].T.astype(jnp.bfloat16)                          # (C, T)
    v_ref[0] = kv[:, c:].astype(jnp.bfloat16)                             # (T, C)


# ----------------------------------------------------------------------------
# Kernel 3: flash attention + proj_out + residual
# ----------------------------------------------------------------------------
def _flash_attn_kernel(ss_ref, xq_ref, kt_ref, v_ref, wq_ref, bq_ref,
                       wp_ref, bp_ref, o_ref, q_scr, m_scr, l_scr, *,
                       use_bf16_exp):
    ki = pl.program_id(2)
    nk = pl.num_programs(2)

    # Per query tile: project q once (1/sqrt(C) folded into wq/bq), reset the
    # online-softmax state, and zero the resident output block (it doubles as
    # the attention accumulator across the ki axis).
    @pl.when(ki == 0)
    def _():
        ss = ss_ref[0]
        scale = ss[0:1, :]
        shift = ss[1:2, :]
        hq = xq_ref[0] * scale + shift                                    # (TQ, C)
        q = jnp.dot(hq.astype(jnp.bfloat16), wq_ref[...],
                    preferred_element_type=jnp.float32) + bq_ref[...]
        q_scr[...] = q.astype(jnp.bfloat16)
        m_scr[...] = jnp.full(m_scr.shape, -jnp.inf, jnp.float32)
        l_scr[...] = jnp.zeros(l_scr.shape, jnp.float32)
        o_ref[0] = jnp.zeros(o_ref.shape[1:], jnp.float32)

    # bf16 MXU matmuls, f32 accumulation.  K arrives pre-transposed (C, TK).
    s = jnp.dot(q_scr[...], kt_ref[0],
                preferred_element_type=jnp.float32)                       # (TQ, TK)
    m_prev = m_scr[...]
    m_new = jnp.maximum(m_prev, jnp.max(s, axis=-1, keepdims=True))
    alpha = jnp.exp(m_prev - m_new)
    e = s - m_new
    if use_bf16_exp:
        p_lo = jnp.exp(e.astype(jnp.bfloat16))    # bf16 EUP exp (v6e/v7x)
        p_hi = p_lo.astype(jnp.float32)
    else:
        p_hi = jnp.exp(e)                         # f32 exp (v5e and earlier)
        p_lo = p_hi.astype(jnp.bfloat16)
    l_scr[...] = alpha * l_scr[...] + jnp.sum(p_hi, axis=-1, keepdims=True)
    o_ref[0] = alpha * o_ref[0] + jnp.dot(p_lo, v_ref[0],
                                          preferred_element_type=jnp.float32)
    m_scr[...] = m_new

    @pl.when(ki == nk - 1)
    def _():
        attended = o_ref[0] * pl.reciprocal(l_scr[...], approx=True)
        proj = jnp.dot(attended.astype(jnp.bfloat16), wp_ref[...],
                       preferred_element_type=jnp.float32) + bp_ref[...]
        o_ref[0] = xq_ref[0] + proj               # residual add, f32


# ----------------------------------------------------------------------------
# Wrapper helpers
# ----------------------------------------------------------------------------
def _pick_tile(hw, target, align):
    """Largest multiple of `align` that divides hw and is <= target (else hw)."""
    if hw <= target:
        return hw
    t = (target // align) * align
    while t >= align:
        if hw % t == 0:
            return t
        t -= align
    return hw


def _vmem_limit_bytes():
    """Generation-aware VMEM budget: ~3/4 of physical capacity (≈96 MiB on
    v5e/v6e, ≈48 MiB on v7x), leaving headroom for compiler-internal scratch."""
    cap = 128 * 1024 * 1024
    try:
        cap = int(getattr(pltpu.get_tpu_info(), "vmem_capacity_bytes", cap))
    except Exception:
        pass
    return int(cap * 3 // 4)


def _use_bf16_exp():
    """bf16 EUP exp only on generations with a bf16 VPU/EUP (v6e, v7x)."""
    try:
        kind = jax.devices()[0].device_kind.lower()
    except Exception:
        return False
    if "tpu" not in kind:
        return False
    return not any(old in kind for old in ("v2", "v3", "v4", "v5"))


# ----------------------------------------------------------------------------
# Forward
# ----------------------------------------------------------------------------
def attn_block_forward(x_nchw, params, *, num_groups=32, eps=1e-6,
                       tq=None, tk=None, t_stat=None):
    """x_nchw: (B, C, H, W) float32.  Returns (B, C, H, W) float32."""
    B, C, H, W = x_nchw.shape
    HW = H * W
    G = num_groups
    assert C % G == 0, "GroupNorm(32) requires C % num_groups == 0"
    cpg = C // G

    # >=256 tiles feed the 256x256 MXUs on v6e/v7x (v5e is fine with them too);
    # tk must keep the K^T blocks lane-dense (multiple of 128) unless == HW.
    if tq is None:
        tq = _pick_tile(HW, 256, 8)
    if tk is None:
        tk = _pick_tile(HW, 256, 128)
    if t_stat is None:
        t_stat = _pick_tile(HW, 1024, 8)
    assert HW % tq == 0 and HW % tk == 0 and HW % t_stat == 0
    assert tk % 128 == 0 or tk == HW
    nq, nk, ns = HW // tq, HW // tk, HW // t_stat

    vmem_limit = _vmem_limit_bytes()
    use_bf16_exp = _use_bf16_exp()

    # NCHW -> (B, HW, C).
    # TODO(synk): keep activations channels-last across the whole Decoder to
    # drop this transpose round-trip (an extra HBM pass per AttnBlock).
    x = jnp.transpose(x_nchw, (0, 2, 3, 1)).reshape(B, HW, C).astype(jnp.float32)

    gamma = params["gamma"].reshape(1, C).astype(jnp.float32)
    beta = params["beta"].reshape(1, C).astype(jnp.float32)

    # Channel->group one-hot (C, G) and its transpose (G, C): group reductions
    # and broadcasts as small matmuls.
    gid = jnp.arange(C) // cpg
    cg = (gid[:, None] == jnp.arange(G)[None, :]).astype(jnp.float32)    # (C, G)
    gc = cg.T                                                            # (G, C)

    # Conv2d 1x1 weights (C_out, C_in, 1, 1) -> (C_in, C_out); bf16 for the MXU.
    def wT(w):
        return jnp.transpose(w.reshape(C, C), (1, 0))

    qscale = float(int(C) ** (-0.5))          # folded into the q projection
    wq = (wT(params["wq"]) * qscale).astype(jnp.bfloat16)
    bq = (params["bq"].reshape(1, C) * qscale).astype(jnp.float32)
    wkv = jnp.concatenate([wT(params["wk"]), wT(params["wv"])],
                          axis=1).astype(jnp.bfloat16)                   # (C, 2C)
    bkv = jnp.concatenate([params["bk"], params["bv"]]).reshape(
        1, 2 * C).astype(jnp.float32)
    wp = wT(params["wp"]).astype(jnp.bfloat16)
    bp = params["bp"].reshape(1, C).astype(jnp.float32)

    # ---- pass 1: tiled GroupNorm stats -> per-channel scale/shift ----------
    stats = pl.pallas_call(
        functools.partial(_group_stats_kernel, eps=float(eps),
                          inv_n=1.0 / float(HW * cpg)),
        out_shape=jax.ShapeDtypeStruct((B, 2, C), jnp.float32),
        grid_spec=pltpu.PrefetchScalarGridSpec(
            num_scalar_prefetch=0,
            grid=(B, ns),
            in_specs=[
                pl.BlockSpec((1, t_stat, C), lambda b, i: (b, i, 0)),
                pl.BlockSpec((1, C), lambda b, i: (0, 0)),
                pl.BlockSpec((1, C), lambda b, i: (0, 0)),
                pl.BlockSpec((C, G), lambda b, i: (0, 0)),
                pl.BlockSpec((G, C), lambda b, i: (0, 0)),
            ],
            out_specs=pl.BlockSpec((1, 2, C), lambda b, i: (b, 0, 0)),
            scratch_shapes=[pltpu.VMEM((2, C), jnp.float32)],
        ),
        compiler_params=pltpu.CompilerParams(
            dimension_semantics=("parallel", "arbitrary"),
            vmem_limit_bytes=vmem_limit),
    )(x, gamma, beta, cg, gc)

    # ---- pass 2: fused normalize + K/V projection (K stored pre-transposed) -
    # TODO(synk): single-buffer the grid-invariant weight blocks in pass 2/3
    # (pipeline_mode=pl.Buffered(1)) where that kwarg is available.
    kt, v = pl.pallas_call(
        functools.partial(_kv_proj_kernel, c=C),
        out_shape=(jax.ShapeDtypeStruct((B, C, HW), jnp.bfloat16),
                   jax.ShapeDtypeStruct((B, HW, C), jnp.bfloat16)),
        grid_spec=pltpu.PrefetchScalarGridSpec(
            num_scalar_prefetch=0,
            grid=(B, nk),
            in_specs=[
                pl.BlockSpec((1, 2, C), lambda b, i: (b, 0, 0)),     # scale/shift
                pl.BlockSpec((1, tk, C), lambda b, i: (b, i, 0)),    # x tile
                pl.BlockSpec((C, 2 * C), lambda b, i: (0, 0)),       # wkv (bf16)
                pl.BlockSpec((1, 2 * C), lambda b, i: (0, 0)),       # bkv
            ],
            out_specs=[
                pl.BlockSpec((1, C, tk), lambda b, i: (b, 0, i)),    # K^T (bf16)
                pl.BlockSpec((1, tk, C), lambda b, i: (b, i, 0)),    # V   (bf16)
            ],
        ),
        compiler_params=pltpu.CompilerParams(
            dimension_semantics=("parallel", "parallel"),
            vmem_limit_bytes=vmem_limit),
    )(stats, x, wkv, bkv)

    # ---- pass 3: flash attention + proj_out + residual ----------------------
    out = pl.pallas_call(
        functools.partial(_flash_attn_kernel, use_bf16_exp=use_bf16_exp),
        out_shape=jax.ShapeDtypeStruct((B, HW, C), jnp.float32),
        grid_spec=pltpu.PrefetchScalarGridSpec(
            num_scalar_prefetch=0,
            grid=(B, nq, nk),
            in_specs=[
                pl.BlockSpec((1, 2, C), lambda b, qi, ki: (b, 0, 0)),    # scale/shift
                pl.BlockSpec((1, tq, C), lambda b, qi, ki: (b, qi, 0)),  # x (q/residual)
                pl.BlockSpec((1, C, tk), lambda b, qi, ki: (b, 0, ki)),  # K^T tile
                pl.BlockSpec((1, tk, C), lambda b, qi, ki: (b, ki, 0)),  # V tile
                pl.BlockSpec((C, C), lambda b, qi, ki: (0, 0)),          # wq (prescaled)
                pl.BlockSpec((1, C), lambda b, qi, ki: (0, 0)),          # bq (prescaled)
                pl.BlockSpec((C, C), lambda b, qi, ki: (0, 0)),          # wp
                pl.BlockSpec((1, C), lambda b, qi, ki: (0, 0)),          # bp
            ],
            out_specs=pl.BlockSpec((1, tq, C), lambda b, qi, ki: (b, qi, 0)),
            scratch_shapes=[
                pltpu.VMEM((tq, C), jnp.bfloat16),   # q tile
                pltpu.VMEM((tq, 1), jnp.float32),    # running max
                pltpu.VMEM((tq, 1), jnp.float32),    # running sum
            ],
        ),
        compiler_params=pltpu.CompilerParams(
            # K/V come pre-projected from HBM, so b and qi are freely parallel
            # (v7x megacore); ki carries the online-softmax accumulator.
            dimension_semantics=("parallel", "parallel", "arbitrary"),
            vmem_limit_bytes=vmem_limit),
    )(stats, x, kt, v, wq, bq, wp, bp)

    # (B, HW, C) -> NCHW
    return jnp.transpose(out.reshape(B, H, W, C), (0, 3, 1, 2))


# ----------------------------------------------------------------------------
# Pure-JAX reference (matches the PyTorch module semantics, all f32)
# ----------------------------------------------------------------------------
def _reference_forward(x_nchw, params, *, num_groups=32, eps=1e-6):
    B, C, H, W = x_nchw.shape
    xg = x_nchw.reshape(B, num_groups, C // num_groups, H, W)
    mean = jnp.mean(xg, axis=(2, 3, 4), keepdims=True)
    var = jnp.mean((xg - mean) ** 2, axis=(2, 3, 4), keepdims=True)
    h = ((xg - mean) / jnp.sqrt(var + eps)).reshape(B, C, H, W)
    h = h * params["gamma"].reshape(1, C, 1, 1) + params["beta"].reshape(1, C, 1, 1)

    def conv1x1(t, w, b):
        return jnp.einsum("bchw,oc->bohw", t, w.reshape(C, C)) + b.reshape(1, C, 1, 1)

    q = conv1x1(h, params["wq"], params["bq"])
    k = conv1x1(h, params["wk"], params["bk"])
    v = conv1x1(h, params["wv"], params["bv"])
    q = q.reshape(B, C, H * W).transpose(0, 2, 1)          # (B, HW, C)
    k = k.reshape(B, C, H * W)                             # (B, C, HW)
    w_ = jnp.einsum("bic,bcj->bij", q, k) * (int(C) ** (-0.5))
    w_ = jax.nn.softmax(w_, axis=2)
    v = v.reshape(B, C, H * W)
    h_ = jnp.einsum("bcj,bij->bci", v, w_).reshape(B, C, H, W)
    h_ = conv1x1(h_, params["wp"], params["bp"])
    return x_nchw + h_


def _init_params(key, C):
    """Deterministic synthetic init (conv-like uniform(-1/sqrt(C), 1/sqrt(C)))."""
    keys = jax.random.split(key, 8)
    bound = 1.0 / jnp.sqrt(float(C))
    u = lambda k, shape: jax.random.uniform(k, shape, jnp.float32, -bound, bound)
    return {
        "gamma": jnp.ones((C,), jnp.float32),
        "beta": jnp.zeros((C,), jnp.float32),
        "wq": u(keys[0], (C, C, 1, 1)), "bq": u(keys[1], (C,)),
        "wk": u(keys[2], (C, C, 1, 1)), "bk": u(keys[3], (C,)),
        "wv": u(keys[4], (C, C, 1, 1)), "bv": u(keys[5], (C,)),
        "wp": u(keys[6], (C, C, 1, 1)), "bp": u(keys[7], (C,)),
    }


if __name__ == "__main__":
    # C must be a multiple of 32 (GroupNorm); 128 keeps everything lane-dense.
    # HW = 512 with 256-wide q/k tiles exercises the multi-tile flash loop
    # (nq = nk = 2), and t_stat=256 exercises the tiled-stats accumulation.
    B, C, H, W = 2, 128, 16, 32
    key = jax.random.PRNGKey(0)
    kx, kp = jax.random.split(key)
    x = jax.random.normal(kx, (B, C, H, W), jnp.float32)
    params = _init_params(kp, C)

    out = attn_block_forward(x, params, t_stat=256)
    out = jax.block_until_ready(out)

    ref = _reference_forward(x, params)
    assert out.shape == (B, C, H, W)
    max_err = float(jnp.max(jnp.abs(out - ref)))
    # bf16 MXU inputs (+ bf16 exp on v6e/v7x) + approx reciprocal => relaxed
    # (but still tight) tolerance.
    assert jnp.allclose(out, ref, atol=3e-2, rtol=3e-2), max_err

    print("KERNEL_OK")
</pallas_src>

<mosaic_0001>
module attributes {stable_mosaic.version = 11 : i64} {
  func.func @_group_stats_kernel(%arg0: i32, %arg1: i32, %arg2: memref<1x256x128xf32, #tpu.memory_space<vmem>>, %arg3: memref<1x128xf32, #tpu.memory_space<vmem>>, %arg4: memref<1x128xf32, #tpu.memory_space<vmem>>, %arg5: memref<128x32xf32, #tpu.memory_space<vmem>>, %arg6: memref<32x128xf32, #tpu.memory_space<vmem>>, %arg7: memref<1x2x128xf32, #tpu.memory_space<vmem>>, %arg8: memref<2x128xf32, #tpu.memory_space<vmem>>) attributes {dimension_semantics = [#tpu.dimension_semantics<parallel>, #tpu.dimension_semantics<arbitrary>], iteration_bounds = array<i64: 2, 2>, scalar_prefetch = 0 : i64, scratch_operands = 1 : i64, tpu.core_type = #tpu.core_type<tc>, window_params = [{transform_indices = @transform_0, window_bounds = array<i64: 1, 256, 128>}, {pipeline_mode = #tpu.pipeline_mode<synchronous>, transform_indices = @transform_1, window_bounds = array<i64: 1, 128>}, {pipeline_mode = #tpu.pipeline_mode<synchronous>, transform_indices = @transform_2, window_bounds = array<i64: 1, 128>}, {pipeline_mode = #tpu.pipeline_mode<synchronous>, transform_indices = @transform_3, window_bounds = array<i64: 128, 32>}, {pipeline_mode = #tpu.pipeline_mode<synchronous>, transform_indices = @transform_4, window_bounds = array<i64: 32, 128>}, {transform_indices = @transform_5, window_bounds = array<i64: 1, 2, 128>}]} {
    %c0_i32 = arith.constant 0 : i32
    %0 = arith.cmpi eq, %arg1, %c0_i32 : i32
    %1 = arith.extui %0 : i1 to i32
    %c0_i32_0 = arith.constant 0 : i32
    %2 = arith.cmpi ne, %1, %c0_i32_0 : i32
    scf.if %2 {
      %cst_9 = arith.constant 0.000000e+00 : f32
      %17 = vector.broadcast %cst_9 : f32 to vector<2x128xf32>
      %c0_10 = arith.constant 0 : index
      %c0_11 = arith.constant 0 : index
      %18 = vector.load %arg8[%c0_10, %c0_11] : memref<2x128xf32, #tpu.memory_space<vmem>>, vector<2x128xf32>
      tpu.vector_store %arg8[%c0_10, %c0_11], %17 {strides = array<i32>} : memref<2x128xf32, #tpu.memory_space<vmem>>, vector<2x128xf32>,
    } else {
    }
    %c0 = arith.constant 0 : index
    %c0_1 = arith.constant 0 : index
    %c0_2 = arith.constant 0 : index
    %3 = vector.load %arg2[%c0, %c0_1, %c0_2] : memref<1x256x128xf32, #tpu.memory_space<vmem>>, vector<1x256x128xf32>
    %4 = vector.shape_cast %3 : vector<1x256x128xf32> to vector<256x128xf32>
    %cst = arith.constant dense<0.000000e+00> : vector<128xf32>
    %5 = vector.multi_reduction <add>, %4, %cst [0] : vector<256x128xf32> to vector<128xf32>
    %6 = vector.shape_cast %5 : vector<128xf32> to vector<1x128xf32>
    %7 = arith.mulf %4, %4 : vector<256x128xf32>
    %cst_3 = arith.constant dense<0.000000e+00> : vector<128xf32>
    %8 = vector.multi_reduction <add>, %7, %cst_3 [0] : vector<256x128xf32> to vector<128xf32>
    %9 = vector.shape_cast %8 : vector<128xf32> to vector<1x128xf32>
    %c0_4 = arith.constant 0 : index
    %c0_5 = arith.constant 0 : index
    %10 = vector.load %arg8[%c0_4, %c0_5] : memref<2x128xf32, #tpu.memory_space<vmem>>, vector<2x128xf32>
    %11 = tpu.concatenate %6, %9 in 0 : vector<1x128xf32>, vector<1x128xf32> -> vector<2x128xf32>
    %12 = arith.addf %10, %11 : vector<2x128xf32>
    %c0_6 = arith.constant 0 : index
    %c0_7 = arith.constant 0 : index
    %13 = vector.load %arg8[%c0_6, %c0_7] : memref<2x128xf32, #tpu.memory_space<vmem>>, vector<2x128xf32>
    tpu.vector_store %arg8[%c0_6, %c0_7], %12 {strides = array<i32>} : memref<2x128xf32, #tpu.memory_space<vmem>>, vector<2x128xf32>,
    %c1_i32 = arith.constant 1 : i32
    %14 = arith.cmpi eq, %arg1, %c1_i32 : i32
    %15 = arith.extui %14 : i1 to i32
    %c0_i32_8 = arith.constant 0 : i32
    %16 = arith.cmpi ne, %15, %c0_i32_8 : i32
    scf.if %16 {
      %c0_9 = arith.constant 0 : index
      %c0_10 = arith.constant 0 : index
      %17 = vector.load %arg8[%c0_9, %c0_10] : memref<2x128xf32, #tpu.memory_space<vmem>>, vector<2x128xf32>
      %18 = vector.extract_strided_slice %17 {offsets = [0, 0], sizes = [1, 128], strides = [1, 1]} : vector<2x128xf32> to vector<1x128xf32>
      %c0_11 = arith.constant 0 : index
      %c0_12 = arith.constant 0 : index
      %19 = vector.load %arg5[%c0_11, %c0_12] : memref<128x32xf32, #tpu.memory_space<vmem>>, vector<128x32xf32>
      %cst_13 = arith.constant dense<0.000000e+00> : vector<1x32xf32>
      %20 = tpu.matmul %18, %19, %cst_13 {dimension_numbers = #tpu.dot_dimension_numbers<[1], [0], [0], [1], [0, 0, 1, 1], [], []>} : vector<1x128xf32>, vector<128x32xf32>, vector<1x32xf32> -> vector<1x32xf32>
      %cst_14 = arith.constant 4.8828125E-4 : f32
      %21 = vector.broadcast %cst_14 : f32 to vector<1x32xf32>
      %22 = arith.mulf %20, %21 : vector<1x32xf32>
      %23 = vector.extract_strided_slice %17 {offsets = [1, 0], sizes = [1, 128], strides = [1, 1]} : vector<2x128xf32> to vector<1x128xf32>
      %c0_15 = arith.constant 0 : index
      %c0_16 = arith.constant 0 : index
      %24 = vector.load %arg5[%c0_15, %c0_16] : memref<128x32xf32, #tpu.memory_space<vmem>>, vector<128x32xf32>
      %cst_17 = arith.constant dense<0.000000e+00> : vector<1x32xf32>
      %25 = tpu.matmul %23, %24, %cst_17 {dimension_numbers = #tpu.dot_dimension_numbers<[1], [0], [0], [1], [0, 0, 1, 1], [], []>} : vector<1x128xf32>, vector<128x32xf32>, vector<1x32xf32> -> vector<1x32xf32>
      %cst_18 = arith.constant 4.8828125E-4 : f32
      %26 = vector.broadcast %cst_18 : f32 to vector<1x32xf32>
      %27 = arith.mulf %25, %26 : vector<1x32xf32>
      %28 = arith.mulf %22, %22 : vector<1x32xf32>
      %29 = arith.subf %27, %28 : vector<1x32xf32>
      %cst_19 = arith.constant 0.000000e+00 : f32
      %30 = vector.broadcast %cst_19 : f32 to vector<1x32xf32>
      %31 = arith.maximumf %29, %30 : vector<1x32xf32>
      %cst_20 = arith.constant 9.99999997E-7 : f32
      %32 = vector.broadcast %cst_20 : f32 to vector<1x32xf32>
      %33 = arith.addf %31, %32 : vector<1x32xf32>
      %34 = math.rsqrt %33 : vector<1x32xf32>
      %c0_21 = arith.constant 0 : index
      %c0_22 = arith.constant 0 : index
      %35 = vector.load %arg6[%c0_21, %c0_22] : memref<32x128xf32, #tpu.memory_space<vmem>>, vector<32x128xf32>
      %cst_23 = arith.constant dense<0.000000e+00> : vector<1x128xf32>
      %36 = tpu.matmul %34, %35, %cst_23 {dimension_numbers = #tpu.dot_dimension_numbers<[1], [0], [0], [1], [0, 0, 1, 1], [], []>} : vector<1x32xf32>, vector<32x128xf32>, vector<1x128xf32> -> vector<1x128xf32>
      %c0_24 = arith.constant 0 : index
      %c0_25 = arith.constant 0 : index
      %37 = vector.load %arg6[%c0_24, %c0_25] : memref<32x128xf32, #tpu.memory_space<vmem>>, vector<32x128xf32>
      %cst_26 = arith.constant dense<0.000000e+00> : vector<1x128xf32>
      %38 = tpu.matmul %22, %37, %cst_26 {dimension_numbers = #tpu.dot_dimension_numbers<[1], [0], [0], [1], [0, 0, 1, 1], [], []>} : vector<1x32xf32>, vector<32x128xf32>, vector<1x128xf32> -> vector<1x128xf32>
      %c0_27 = arith.constant 0 : index
      %c0_28 = arith.constant 0 : index
      %39 = vector.load %arg3[%c0_27, %c0_28] : memref<1x128xf32, #tpu.memory_space<vmem>>, vector<1x128xf32>
      %40 = arith.mulf %39, %36 : vector<1x128xf32>
      %c0_29 = arith.constant 0 : index
      %c0_30 = arith.constant 0 : index
      %41 = vector.load %arg4[%c0_29, %c0_30] : memref<1x128xf32, #tpu.memory_space<vmem>>, vector<1x128xf32>
      %42 = arith.mulf %38, %40 : vector<1x128xf32>
      %43 = arith.subf %41, %42 : vector<1x128xf32>
      %44 = tpu.concatenate %40, %43 in 0 : vector<1x128xf32>, vector<1x128xf32> -> vector<2x128xf32>
      %c0_31 = arith.constant 0 : index
      %c0_32 = arith.constant 0 : index
      %c0_33 = arith.constant 0 : index
      %45 = vector.load %arg7[%c0_31, %c0_32, %c0_33] : memref<1x2x128xf32, #tpu.memory_space<vmem>>, vector<1x2x128xf32>
      %46 = vector.shape_cast %45 : vector<1x2x128xf32> to vector<2x128xf32>
      %47 = vector.shape_cast %44 : vector<2x128xf32> to vector<1x2x128xf32>
      tpu.vector_store %arg7[%c0_31, %c0_32, %c0_33], %47 {strides = array<i32>} : memref<1x2x128xf32, #tpu.memory_space<vmem>>, vector<1x2x128xf32>,
    } else {
    }
    return
  }
  func.func @transform_0(%arg0: i32, %arg1: i32) -> (i32, i32, i32) {
    %c0_i32 = arith.constant 0 : i32
    %c0_i32_0 = arith.constant 0 : i32
    return %arg0, %arg1, %c0_i32 : i32, i32, i32
  }
  func.func @transform_1(%arg0: i32, %arg1: i32) -> (i32, i32) {
    %c0_i32 = arith.constant 0 : i32
    %c0_i32_0 = arith.constant 0 : i32
    %c0_i32_1 = arith.constant 0 : i32
    return %c0_i32, %c0_i32_0 : i32, i32
  }
  func.func @transform_2(%arg0: i32, %arg1: i32) -> (i32, i32) {
    %c0_i32 = arith.constant 0 : i32
    %c0_i32_0 = arith.constant 0 : i32
    %c0_i32_1 = arith.constant 0 : i32
    return %c0_i32, %c0_i32_0 : i32, i32
  }
  func.func @transform_3(%arg0: i32, %arg1: i32) -> (i32, i32) {
    %c0_i32 = arith.constant 0 : i32
    %c0_i32_0 = arith.constant 0 : i32
    %c0_i32_1 = arith.constant 0 : i32
    return %c0_i32, %c0_i32_0 : i32, i32
  }
  func.func @transform_4(%arg0: i32, %arg1: i32) -> (i32, i32) {
    %c0_i32 = arith.constant 0 : i32
    %c0_i32_0 = arith.constant 0 : i32
    %c0_i32_1 = arith.constant 0 : i32
    return %c0_i32, %c0_i32_0 : i32, i32
  }
  func.func @transform_5(%arg0: i32, %arg1: i32) -> (i32, i32, i32) {
    %c0_i32 = arith.constant 0 : i32
    %c0_i32_0 = arith.constant 0 : i32
    %c0_i32_1 = arith.constant 0 : i32
    return %arg0, %c0_i32, %c0_i32_0 : i32, i32, i32
  }
}

</mosaic_0001>

<llo_original>
// kernel: tpu_custom_call.1
$region0: #{tpu_custom_call.1}
  #allocation0 [shape = 'u32[]', space=smem, size = 0x4, offset = 0x4, fixed_abs, tag = 'smem constant byte address 0x4 - core index']
  #allocation1 [shape = 'u32[144,128]{1,0:T(1,128)}', space=vmem, size = 0x12000, scoped, tag = 'internal scratch']
  #allocation2 [shape = 'f32[2,128]{1,0:T(2,128)}', space=vmem, size = 0x400, scoped, tag = 'scratch operand']
  %s0 = inlined_call_operand.hbm [shape: f32[2,512,128], index: 0, kind: input, shape index: {}]
  %s1 = inlined_call_operand.hbm [shape: f32[1,128], index: 1, kind: input, shape index: {}]
  %s2 = inlined_call_operand.hbm [shape: f32[1,128], index: 2, kind: input, shape index: {}]
  %s3 = inlined_call_operand.hbm [shape: f32[128,32], index: 3, kind: input, shape index: {}]
  %s4 = inlined_call_operand.hbm [shape: f32[32,128], index: 4, kind: input, shape index: {}]
  %s5 = inlined_call_operand.hbm [shape: f32[2,2,128], index: 5, kind: output, shape index: {}]
  %s6 = sld [smem:[#allocation0]]
  $region81: #{tpu_custom_call.1} parent=0
    _
  %s8 = ssub.s32 1, %s6
  %s9 = scalar_select 0, %s8, %s6
  $region1: #{tpu_custom_call.1} parent=0
    #allocation3 [shape = 'u8[262144]{0}', space=vmem, size = 0x40000, scoped, tag = 'input window, operand 0']
    #allocation4 [shape = 's32[2]{0}', space=sflag, size = 0x8, scoped, tag = 'scoped memory for tpu_custom_call.1']
    #allocation5 [shape = 's32[2]{0}', space=sflag, size = 0x8, scoped, tag = 'scoped memory for tpu_custom_call.1']
    #allocation6 [shape = 'u8[512]{0}', space=vmem, size = 0x400, scoped, tag = 'input window, operand 1, single buffered']
    #allocation7 [shape = 's32[1]{0}', space=sflag, size = 0x4, scoped, tag = 'scoped memory for tpu_custom_call.1']
    #allocation8 [shape = 'u8[512]{0}', space=vmem, size = 0x400, scoped, tag = 'input window, operand 2, single buffered']
    #allocation9 [shape = 'u8[65536]{0}', space=vmem, size = 0x10000, scoped, tag = 'input window, operand 3, single buffered']
    #allocation10 [shape = 's32[1]{0}', space=sflag, size = 0x4, scoped, tag = 'scoped memory for tpu_custom_call.1']
    #allocation11 [shape = 'u8[16384]{0}', space=vmem, size = 0x4000, scoped, tag = 'input window, operand 4, single buffered']
    #allocation12 [shape = 'u8[2048]{0}', space=vmem, size = 0x800, scoped, tag = 'output window, operand 0']
    %10 = vsyncpa [#allocation4], 0
    %s11 = scalar_lea.sflag [#allocation4], 1
    %12 = vsyncpa %s11, 0
    %13 = vsyncpa [#allocation7], 0
    %14 = vsyncpa [#allocation10], 0
    %15 = vsyncpa [#allocation5], 0
    %s16 = scalar_lea.sflag [#allocation5], 1
    %17 = vsyncpa %s16, 0
    loop: start=0, step=1, limit=6
    $region2: #{tpu_custom_call.1} parent=1 // loop_pre_header
      _
    $region3: #{tpu_custom_call.1} parent=1 // loop_header
      %s19 = sphi 0, %s23
      %p20 = scmp.ge.s32.totalorder %s19, 6
      %s26 = sphi 0, %s38
      %s27 = sphi 0, %s34
      %s28 = sphi 0, %s26
      %s29 = sphi 0, %s27
      %s30 = sphi 0, %s28
      %s31 = sphi 0, %s29
      %s43 = sphi 0, %s45
      %s46 = sphi 0, %s43
      %s47 = sphi 0, %s46
      %s63 = sphi 0, %s47
      %s67 = sphi 0, %s67
      %s69 = sphi 0, %s67
      %s70 = sphi 0, %s69
      %s84 = sphi 0, %s70
      %s88 = sphi 0, %s88
      %s90 = sphi 0, %s88
      %s91 = sphi 0, %s90
      %s105 = sphi 0, %s91
      %s109 = sphi 0, %s109
      %s111 = sphi 0, %s109
      %s112 = sphi 0, %s111
      %s126 = sphi 0, %s112
      %s130 = sphi 0, %s130
      %s132 = sphi 0, %s130
      %s133 = sphi 0, %s132
      %s147 = sphi 0, %s133
      %s153 = sphi 0, %s155
      %s156 = sphi 0, %s153
      %s157 = sphi 0, %s156
      %s173 = sphi 0, %s157
    $region4: #{tpu_custom_call.1} parent=1 // loop_header_branch
      %22 = sbr.rel (%p20) target = $region8
    $region5: #{tpu_custom_call.1} parent=1 // loop_body
      %s24 = ssub.s32 %s19, 1
      %s25 = ssub.s32 %s19, 2
      %s32 = sadd.s32 1, %s27
      %p33 = scmp.ge.s32.totalorder %s32, 2
      %s34 = scalar_select %p33, 0, %s32
      %s35 = sadd.s32 1, %s26
      %s36 = scalar_select %p33, %s35, %s26
      %p37 = scmp.ge.s32.totalorder %s36, 2
      %s38 = scalar_select %p37, 0, %s36
      %s39 = ssub.s32 %s26, %s38
      %s40 = ssub.s32 %s27, %s34
      %s41 = sor.u32 %s39, %s40
      %p42 = scmp.eq.s32.totalorder %s41, 0
      %s44 = sadd.s32 %s43, 1
      %s45 = scalar_select %p42, %s43, %s44
      %p48 = pneg %p42
      %p49 = scmp.eq.s32.totalorder %s19, 3
      %p50 = por %p48, %p49
      %p51 = scmp.ne.s32.totalorder %s43, %s46
      %p52 = scmp.eq.s32.totalorder %s19, 0
      %p53 = por %p51, %p52
      %p54 = scmp.ne.s32.totalorder %s43, %s46
      %p55 = scmp.eq.s32.totalorder %s24, 3
      %p56 = por %p54, %p55
      %p57 = scmp.ne.s32.totalorder %s46, %s47
      %p58 = scmp.eq.s32.totalorder %s24, 0
      %p59 = por %p57, %p58
      %p60 = scmp.ne.s32.totalorder %s46, %s47
      %p61 = scmp.eq.s32.totalorder %s25, 3
      %p62 = por %p60, %p61
      %p64 = scmp.ne.s32.totalorder %s47, %s63
      %p65 = scmp.eq.s32.totalorder %s25, 0
      %p66 = por %p64, %p65
      %s68 = sadd.s32 %s67, 1
      %p71 = scmp.eq.s32.totalorder %s19, 3
      %p72 = scmp.ne.s32.totalorder %s67, %s69
      %p73 = scmp.eq.s32.totalorder %s19, 0
      %p74 = por %p72, %p73
      %p75 = scmp.ne.s32.totalorder %s67, %s69
      %p76 = scmp.eq.s32.totalorder %s24, 3
      %p77 = por %p75, %p76
      %p78 = scmp.ne.s32.totalorder %s69, %s70
      %p79 = scmp.eq.s32.totalorder %s24, 0
      %p80 = por %p78, %p79
      %p81 = scmp.ne.s32.totalorder %s69, %s70
      %p82 = scmp.eq.s32.totalorder %s25, 3
      %p83 = por %p81, %p82
      %p85 = scmp.ne.s32.totalorder %s70, %s84
      %p86 = scmp.eq.s32.totalorder %s25, 0
      %p87 = por %p85, %p86
      %s89 = sadd.s32 %s88, 1
      %p92 = scmp.eq.s32.totalorder %s19, 3
      %p93 = scmp.ne.s32.totalorder %s88, %s90
      %p94 = scmp.eq.s32.totalorder %s19, 0
      %p95 = por %p93, %p94
      %p96 = scmp.ne.s32.totalorder %s88, %s90
      %p97 = scmp.eq.s32.totalorder %s24, 3
      %p98 = por %p96, %p97
      %p99 = scmp.ne.s32.totalorder %s90, %s91
      %p100 = scmp.eq.s32.totalorder %s24, 0
      %p101 = por %p99, %p100
      %p102 = scmp.ne.s32.totalorder %s90, %s91
      %p103 = scmp.eq.s32.totalorder %s25, 3
      %p104 = por %p102, %p103
      %p106 = scmp.ne.s32.totalorder %s91, %s105
      %p107 = scmp.eq.s32.totalorder %s25, 0
      %p108 = por %p106, %p107
      %s110 = sadd.s32 %s109, 1
      %p113 = scmp.eq.s32.totalorder %s19, 3
      %p114 = scmp.ne.s32.totalorder %s109, %s111
      %p115 = scmp.eq.s32.totalorder %s19, 0
      %p116 = por %p114, %p115
      %p117 = scmp.ne.s32.totalorder %s109, %s111
      %p118 = scmp.eq.s32.totalorder %s24, 3
      %p119 = por %p117, %p118
      %p120 = scmp.ne.s32.totalorder %s111, %s112
      %p121 = scmp.eq.s32.totalorder %s24, 0
      %p122 = por %p120, %p121
      %p123 = scmp.ne.s32.totalorder %s111, %s112
      %p124 = scmp.eq.s32.totalorder %s25, 3
      %p125 = por %p123, %p124
      %p127 = scmp.ne.s32.totalorder %s112, %s126
      %p128 = scmp.eq.s32.totalorder %s25, 0
      %p129 = por %p127, %p128
      %s131 = sadd.s32 %s130, 1
      %p134 = scmp.eq.s32.totalorder %s19, 3
      %p135 = scmp.ne.s32.totalorder %s130, %s132
      %p136 = scmp.eq.s32.totalorder %s19, 0
      %p137 = por %p135, %p136
      %p138 = scmp.ne.s32.totalorder %s130, %s132
      %p139 = scmp.eq.s32.totalorder %s24, 3
      %p140 = por %p138, %p139
      %p141 = scmp.ne.s32.totalorder %s132, %s133
      %p142 = scmp.eq.s32.totalorder %s24, 0
      %p143 = por %p141, %p142
      %p144 = scmp.ne.s32.totalorder %s132, %s133
      %p145 = scmp.eq.s32.totalorder %s25, 3
      %p146 = por %p144, %p145
      %p148 = scmp.ne.s32.totalorder %s133, %s147
      %p149 = scmp.eq.s32.totalorder %s25, 0
      %p150 = por %p148, %p149
      %s151 = ssub.s32 %s26, %s38
      %p152 = scmp.eq.s32.totalorder %s151, 0
      %s154 = sadd.s32 %s153, 1
      %s155 = scalar_select %p152, %s153, %s154
      %p158 = pneg %p152
      %p159 = scmp.eq.s32.totalorder %s19, 3
      %p160 = por %p158, %p159
      %p161 = scmp.ne.s32.totalorder %s153, %s156
      %p162 = scmp.eq.s32.totalorder %s19, 0
      %p163 = por %p161, %p162
      %p164 = scmp.ne.s32.totalorder %s153, %s156
      %p165 = scmp.eq.s32.totalorder %s24, 3
      %p166 = por %p164, %p165
      %p167 = scmp.ne.s32.totalorder %s156, %s157
      %p168 = scmp.eq.s32.totalorder %s24, 0
      %p169 = por %p167, %p168
      %p170 = scmp.ne.s32.totalorder %s156, %s157
      %p171 = scmp.eq.s32.totalorder %s25, 3
      %p172 = por %p170, %p171
      %p174 = scmp.ne.s32.totalorder %s157, %s173
      %p175 = scmp.eq.s32.totalorder %s25, 0
      %p176 = por %p174, %p175
      %p177 = scmp.le.s32.totalorder 1, %s19
      %p178 = scmp.lt.s32.totalorder %s19, 5
      %p179 = pnand %p177, %p178
      %p180 = pneg %p179
      // Predicated region
      $region9: #{tpu_custom_call.1} parent=5 // pred_check
        _
      $region10: #{tpu_custom_call.1} parent=5 // pred_check_branch
        %182 = sbr.rel (%p179) target = $region12
      $region11: #{tpu_custom_call.1} parent=5 // pred_region
        %s183 = ssub.s32 %s19, 1
        // Predicated region
        $region13: #{tpu_custom_call.1} parent=11 // pred_check
          %p184 = pneg %p80
        $region14: #{tpu_custom_call.1} parent=11 // pred_check_branch
          %186 = sbr.rel (%p184) target = $region16
        $region15: #{tpu_custom_call.1} parent=11 // pred_region
          %s188 = ssub.s32 16, 16
          %189 = vsyncadd [#allocation7], %s188
          %s191 = sshll.u32 [#allocation6], 4
          %s192 = int_to_ptr.vmem [resolvable:$true] %s191
          %194 = dma.hbm_to_vmem [thread:$0]  %s1, 16, %s192, [#allocation7]
        $region16: #{tpu_custom_call.1} parent=11 // pred_fallthru
          _
        // Predicated region
        $region17: #{tpu_custom_call.1} parent=11 // pred_check
          %p195 = pneg %p101
        $region18: #{tpu_custom_call.1} parent=11 // pred_check_branch
          %197 = sbr.rel (%p195) target = $region20
        $region19: #{tpu_custom_call.1} parent=11 // pred_region
          %s199 = ssub.s32 16, 16
          %200 = vsyncadd [#allocation7], %s199
          %s202 = sshll.u32 [#allocation8], 4
          %s203 = int_to_ptr.vmem [resolvable:$true] %s202
          %205 = dma.hbm_to_vmem [thread:$0]  %s2, 16, %s203, [#allocation7]
        $region20: #{tpu_custom_call.1} parent=11 // pred_fallthru
          _
        // Predicated region
        $region21: #{tpu_custom_call.1} parent=11 // pred_check
          %p206 = pneg %p122
        $region22: #{tpu_custom_call.1} parent=11 // pred_check_branch
          %208 = sbr.rel (%p206) target = $region24
        $region23: #{tpu_custom_call.1} parent=11 // pred_region
          %s210 = ssub.s32 2048, 2048
          %211 = vsyncadd [#allocation10], %s210
          %s212 = sshll.u32 [#allocation9], 4
          %s213 = int_to_ptr.vmem [resolvable:$true] %s212
          %218 = dma.hbm_to_vmem [thread:$0]  %s3, 2048, %s213, [#allocation10], 128, 128, 8
        $region24: #{tpu_custom_call.1} parent=11 // pred_fallthru
          _
        // Predicated region
        $region25: #{tpu_custom_call.1} parent=11 // pred_check
          %p219 = pneg %p143
        $region26: #{tpu_custom_call.1} parent=11 // pred_check_branch
          %221 = sbr.rel (%p219) target = $region28
        $region27: #{tpu_custom_call.1} parent=11 // pred_region
          %s223 = ssub.s32 512, 512
          %224 = vsyncadd [#allocation10], %s223
          %s225 = sshll.u32 [#allocation11], 4
          %s226 = int_to_ptr.vmem [resolvable:$true] %s225
          %231 = dma.hbm_to_vmem [thread:$0]  %s4, 512, %s226, [#allocation10], 128, 128, 8
        $region28: #{tpu_custom_call.1} parent=11 // pred_fallthru
          _
      $region12: #{tpu_custom_call.1} parent=5 // pred_fallthru
        _
      %p232 = scmp.lt.s32.totalorder %s19, 4
      // Predicated region
      $region29: #{tpu_custom_call.1} parent=5 // pred_check
        %p233 = pneg %p232
      $region30: #{tpu_custom_call.1} parent=5 // pred_check_branch
        %235 = sbr.rel (%p233) target = $region32
      $region31: #{tpu_custom_call.1} parent=5 // pred_region
        // Predicated region
        $region33: #{tpu_custom_call.1} parent=31 // pred_check
          %p236 = pneg %p53
        $region34: #{tpu_custom_call.1} parent=31 // pred_check_branch
          %238 = sbr.rel (%p236) target = $region36
        $region35: #{tpu_custom_call.1} parent=31 // pred_region
          %s239 = sand.u32 %s43, 1
          %s240 = scalar_lea.sflag [#allocation4], %s239
          %s241 = sand.u32 %s43, 1
          %s242 = smul.addr %s241, 256
          %s243 = scalar_lea.vmem [#allocation3], %s242
          %s244 = smul.u32 32, %s27
          %s246 = ssub.s32 4096, 4096
          %247 = vsyncadd %s240, %s246
          %s248 = smul.addr %s26, 64
          %s249 = sadd.s32 %s244, %s248
          %s250 = smul.addr %s249, 128
          %s251 = scalar_lea.hbm %s0, %s250
          %s252 = sshll.u32 %s243, 4
          %s253 = int_to_ptr.vmem [resolvable:$true] %s252
          %258 = dma.hbm_to_vmem [thread:$0]  %s251, 4096, %s253, %s240, 128, 128, 8
        $region36: #{tpu_custom_call.1} parent=31 // pred_fallthru
          _
      $region32: #{tpu_custom_call.1} parent=5 // pred_fallthru
        _
      %p259 = scmp.le.s32.totalorder 1, %s19
      %p260 = scmp.lt.s32.totalorder %s19, 5
      %p261 = pnand %p259, %p260
      %p262 = pneg %p261
      // Predicated region
      $region37: #{tpu_custom_call.1} parent=5 // pred_check
        _
      $region38: #{tpu_custom_call.1} parent=5 // pred_check_branch
        %264 = sbr.rel (%p261) target = $region40
      $region39: #{tpu_custom_call.1} parent=5 // pred_region
        %s265 = ssub.s32 %s19, 1
        %s266 = sand.u32 %s46, 1
        %s267 = scalar_lea.sflag [#allocation4], %s266
        %s268 = sand.u32 %s46, 1
        %s269 = smul.addr %s268, 256
        %s270 = scalar_lea.vmem [#allocation3], %s269
        // Predicated region
        $region41: #{tpu_custom_call.1} parent=39 // pred_check
          %p271 = pneg %p59
        $region42: #{tpu_custom_call.1} parent=39 // pred_check_branch
          %273 = sbr.rel (%p271) target = $region44
        $region43: #{tpu_custom_call.1} parent=39 // pred_region
          %274 = dma.done %s267, 4096
        $region44: #{tpu_custom_call.1} parent=39 // pred_fallthru
          _
        // Predicated region
        $region45: #{tpu_custom_call.1} parent=39 // pred_check
          %p275 = pneg %p80
        $region46: #{tpu_custom_call.1} parent=39 // pred_check_branch
          %277 = sbr.rel (%p275) target = $region48
        $region47: #{tpu_custom_call.1} parent=39 // pred_region
          %278 = dma.done [#allocation7], 16
        $region48: #{tpu_custom_call.1} parent=39 // pred_fallthru
          _
        // Predicated region
        $region49: #{tpu_custom_call.1} parent=39 // pred_check
          %p279 = pneg %p101
        $region50: #{tpu_custom_call.1} parent=39 // pred_check_branch
          %281 = sbr.rel (%p279) target = $region52
        $region51: #{tpu_custom_call.1} parent=39 // pred_region
          %282 = dma.done [#allocation7], 16
        $region52: #{tpu_custom_call.1} parent=39 // pred_fallthru
          _
        // Predicated region
        $region53: #{tpu_custom_call.1} parent=39 // pred_check
          %p283 = pneg %p122
        $region54: #{tpu_custom_call.1} parent=39 // pred_check_branch
          %285 = sbr.rel (%p283) target = $region56
        $region55: #{tpu_custom_call.1} parent=39 // pred_region
          %286 = dma.done [#allocation10], 2048
        $region56: #{tpu_custom_call.1} parent=39 // pred_fallthru
          _
        // Predicated region
        $region57: #{tpu_custom_call.1} parent=39 // pred_check
          %p287 = pneg %p143
        $region58: #{tpu_custom_call.1} parent=39 // pred_check_branch
          %289 = sbr.rel (%p287) target = $region60
        $region59: #{tpu_custom_call.1} parent=39 // pred_region
          %290 = dma.done [#allocation10], 512
        $region60: #{tpu_custom_call.1} parent=39 // pred_fallthru
          _
        %s291 = sand.u32 %s46, 1
        %s292 = scalar_lea.sflag [#allocation4], %s291
        %s293 = sand.u32 %s46, 1
        %s294 = smul.addr %s293, 256
        %s295 = scalar_lea.vmem [#allocation3], %s294
        %p296 = pneg %p59
        %p297 = pneg %p56
        %p298 = pneg %p80
        %p299 = pneg %p77
        %p300 = pneg %p101
        %p301 = pneg %p98
        %p302 = pneg %p122
        %p303 = pneg %p119
        %p304 = pneg %p143
        %p305 = pneg %p140
        %p306 = pneg %p169
        %p307 = pneg %p166
        %s308 = sand.u32 %s156, 1
        %s309 = scalar_lea.sflag [#allocation5], %s308
        %s310 = sand.u32 %s156, 1
        %s311 = smul.addr %s310, 2
        %s312 = scalar_lea.vmem [#allocation12], %s311
        %s313 = smul.u32 32, %s29
        %p314 = scmp.eq.s32.totalorder %s29, 0
        // Predicated region
        $region61: #{tpu_custom_call.1} parent=39 // pred_check
          %p315 = pneg %p314
        $region62: #{tpu_custom_call.1} parent=39 // pred_check_branch
          %317 = sbr.rel (%p315) target = $region64
        $region63: #{tpu_custom_call.1} parent=39 // pred_region
          %318 = vst [vmem:[#allocation2] sm:$0x3] 0.0
        $region64: #{tpu_custom_call.1} parent=39 // pred_fallthru
          _
        %v319 = vld [vmem:[%s270] sm:$0xff]
        %v320 = vld [vmem:[%s270 + $0x8] sm:$0xff]
        %v321 = vld [vmem:[%s270 + $0x10] sm:$0xff]
        %v322 = vld [vmem:[%s270 + $0x18] sm:$0xff]
        %v323 = vld [vmem:[%s270 + $0x20] sm:$0xff]
        %v324 = vld [vmem:[%s270 + $0x28] sm:$0xff]
        %v325 = vld [vmem:[%s270 + $0x30] sm:$0xff]
        %v326 = vld [vmem:[%s270 + $0x38] sm:$0xff]
        %v327 = vld [vmem:[%s270 + $0x40] sm:$0xff]
        %v328 = vld [vmem:[%s270 + $0x48] sm:$0xff]
        %v329 = vld [vmem:[%s270 + $0x50] sm:$0xff]
        %v330 = vld [vmem:[%s270 + $0x58] sm:$0xff]
        %v331 = vld [vmem:[%s270 + $0x60] sm:$0xff]
        %v332 = vld [vmem:[%s270 + $0x68] sm:$0xff]
        %v333 = vld [vmem:[%s270 + $0x70] sm:$0xff]
        %v334 = vld [vmem:[%s270 + $0x78] sm:$0xff]
        %v335 = vld [vmem:[%s270 + $0x80] sm:$0xff]
        %v336 = vld [vmem:[%s270 + $0x88] sm:$0xff]
        %v337 = vld [vmem:[%s270 + $0x90] sm:$0xff]
        %v338 = vld [vmem:[%s270 + $0x98] sm:$0xff]
        %v339 = vld [vmem:[%s270 + $0xa0] sm:$0xff]
        %v340 = vld [vmem:[%s270 + $0xa8] sm:$0xff]
        %v341 = vld [vmem:[%s270 + $0xb0] sm:$0xff]
        %v342 = vld [vmem:[%s270 + $0xb8] sm:$0xff]
        %v343 = vld [vmem:[%s270 + $0xc0] sm:$0xff]
        %v344 = vld [vmem:[%s270 + $0xc8] sm:$0xff]
        %v345 = vld [vmem:[%s270 + $0xd0] sm:$0xff]
        %v346 = vld [vmem:[%s270 + $0xd8] sm:$0xff]
        %v347 = vld [vmem:[%s270 + $0xe0] sm:$0xff]
        %v348 = vld [vmem:[%s270 + $0xe8] sm:$0xff]
        %v349 = vld [vmem:[%s270 + $0xf0] sm:$0xff]
        %v350 = vld [vmem:[%s270 + $0xf8] sm:$0xff]
        %v351 = vadd.f32 %v319, %v320
        %v352 = vadd.f32 %v351, %v321
        %v353 = vadd.f32 %v352, %v322
        %v354 = vadd.f32 %v353, %v323
        %v355 = vadd.f32 %v354, %v324
        %v356 = vadd.f32 %v355, %v325
        %v357 = vadd.f32 %v356, %v326
        %v358 = vadd.f32 %v357, %v327
        %v359 = vadd.f32 %v358, %v328
        %v360 = vadd.f32 %v359, %v329
        %v361 = vadd.f32 %v360, %v330
        %v362 = vadd.f32 %v361, %v331
        %v363 = vadd.f32 %v362, %v332
        %v364 = vadd.f32 %v363, %v333
        %v365 = vadd.f32 %v364, %v334
        %v366 = vadd.f32 %v365, %v335
        %v367 = vadd.f32 %v366, %v336
        %v368 = vadd.f32 %v367, %v337
        %v369 = vadd.f32 %v368, %v338
        %v370 = vadd.f32 %v369, %v339
        %v371 = vadd.f32 %v370, %v340
        %v372 = vadd.f32 %v371, %v341
        %v373 = vadd.f32 %v372, %v342
        %v374 = vadd.f32 %v373, %v343
        %v375 = vadd.f32 %v374, %v344
        %v376 = vadd.f32 %v375, %v345
        %v377 = vadd.f32 %v376, %v346
        %v378 = vadd.f32 %v377, %v347
        %v379 = vadd.f32 %v378, %v348
        %v380 = vadd.f32 %v379, %v349
        %v381 = vadd.f32 %v380, %v350
        %v382 = vrot.slane %v381, 4
        %v383 = vadd.f32 %v381, %v382
        %v384 = vrot.slane %v383, 2
        %v385 = vadd.f32 %v383, %v384
        %v386 = vrot.slane %v385, 1
        %v387 = vadd.f32 %v385, %v386
        %v388 = vmul.f32 %v319, %v319
        %v389 = vmul.f32 %v320, %v320
        %v390 = vmul.f32 %v321, %v321
        %v391 = vmul.f32 %v322, %v322
        %v392 = vmul.f32 %v323, %v323
        %v393 = vmul.f32 %v324, %v324
        %v394 = vmul.f32 %v325, %v325
        %v395 = vmul.f32 %v326, %v326
        %v396 = vmul.f32 %v327, %v327
        %v397 = vmul.f32 %v328, %v328
        %v398 = vmul.f32 %v329, %v329
        %v399 = vmul.f32 %v330, %v330
        %v400 = vmul.f32 %v331, %v331
        %v401 = vmul.f32 %v332, %v332
        %v402 = vmul.f32 %v333, %v333
        %v403 = vmul.f32 %v334, %v334
        %v404 = vmul.f32 %v335, %v335
        %v405 = vmul.f32 %v336, %v336
        %v406 = vmul.f32 %v337, %v337
        %v407 = vmul.f32 %v338, %v338
        %v408 = vmul.f32 %v339, %v339
        %v409 = vmul.f32 %v340, %v340
        %v410 = vmul.f32 %v341, %v341
        %v411 = vmul.f32 %v342, %v342
        %v412 = vmul.f32 %v343, %v343
        %v413 = vmul.f32 %v344, %v344
        %v414 = vmul.f32 %v345, %v345
        %v415 = vmul.f32 %v346, %v346
        %v416 = vmul.f32 %v347, %v347
        %v417 = vmul.f32 %v348, %v348
        %v418 = vmul.f32 %v349, %v349
        %v419 = vmul.f32 %v350, %v350
        %v420 = vadd.f32 %v388, %v389
        %v421 = vadd.f32 %v420, %v390
        %v422 = vadd.f32 %v421, %v391
        %v423 = vadd.f32 %v422, %v392
        %v424 = vadd.f32 %v423, %v393
        %v425 = vadd.f32 %v424, %v394
        %v426 = vadd.f32 %v425, %v395
        %v427 = vadd.f32 %v426, %v396
        %v428 = vadd.f32 %v427, %v397
        %v429 = vadd.f32 %v428, %v398
        %v430 = vadd.f32 %v429, %v399
        %v431 = vadd.f32 %v430, %v400
        %v432 = vadd.f32 %v431, %v401
        %v433 = vadd.f32 %v432, %v402
        %v434 = vadd.f32 %v433, %v403
        %v435 = vadd.f32 %v434, %v404
        %v436 = vadd.f32 %v435, %v405
        %v437 = vadd.f32 %v436, %v406
        %v438 = vadd.f32 %v437, %v407
        %v439 = vadd.f32 %v438, %v408
        %v440 = vadd.f32 %v439, %v409
        %v441 = vadd.f32 %v440, %v410
        %v442 = vadd.f32 %v441, %v411
        %v443 = vadd.f32 %v442, %v412
        %v444 = vadd.f32 %v443, %v413
        %v445 = vadd.f32 %v444, %v414
        %v446 = vadd.f32 %v445, %v415
        %v447 = vadd.f32 %v446, %v416
        %v448 = vadd.f32 %v447, %v417
        %v449 = vadd.f32 %v448, %v418
        %v450 = vadd.f32 %v449, %v419
        %v451 = vrot.slane %v450, 4
        %v452 = vadd.f32 %v450, %v451
        %v453 = vrot.slane %v452, 2
        %v454 = vadd.f32 %v452, %v453
        %v455 = vrot.slane %v454, 1
        %v456 = vadd.f32 %v454, %v455
        %v457 = vld [vmem:[#allocation2] sm:$0x3]
        %vm458 = vcmask 1040384
        %v459 = vsel %vm458, %v387, %v456
        %v460 = vadd.f32 %v457, %v459
        %461 = vst [vmem:[#allocation2] sm:$0x3] %v460
        %p462 = scmp.eq.s32.totalorder %s29, 1
        // Predicated region
        $region65: #{tpu_custom_call.1} parent=39 // pred_check
          %p463 = pneg %p462
        $region66: #{tpu_custom_call.1} parent=39 // pred_check_branch
          %465 = sbr.rel (%p463) target = $region68
        $region67: #{tpu_custom_call.1} parent=39 // pred_region
          %v466 = vld [vmem:[#allocation2] sm:$0x3]
          %v467 = vld [vmem:[#allocation9] sm:$0xff]
          %v468 = vld [vmem:[#allocation9 + $0x8] sm:$0xff]
          %v469 = vld [vmem:[#allocation9 + $0x10] sm:$0xff]
          %v470 = vld [vmem:[#allocation9 + $0x18] sm:$0xff]
          %v471 = vld [vmem:[#allocation9 + $0x20] sm:$0xff]
          %v472 = vld [vmem:[#allocation9 + $0x28] sm:$0xff]
          %v473 = vld [vmem:[#allocation9 + $0x30] sm:$0xff]
          %v474 = vld [vmem:[#allocation9 + $0x38] sm:$0xff]
          %v475 = vld [vmem:[#allocation9 + $0x40] sm:$0xff]
          %v476 = vld [vmem:[#allocation9 + $0x48] sm:$0xff]
          %v477 = vld [vmem:[#allocation9 + $0x50] sm:$0xff]
          %v478 = vld [vmem:[#allocation9 + $0x58] sm:$0xff]
          %v479 = vld [vmem:[#allocation9 + $0x60] sm:$0xff]
          %v480 = vld [vmem:[#allocation9 + $0x68] sm:$0xff]
          %v481 = vld [vmem:[#allocation9 + $0x70] sm:$0xff]
          %v482 = vld [vmem:[#allocation9 + $0x78] sm:$0xff]
          %483 = vmatprep.subr.mxu0 0.0
          %484 = vmatpush1.msra.mxu0 %v467
          %485 = vmatprep.subr.mxu0 0.0
          %486 = vmatpush1.msra.mxu0 %v468
          %487 = vmatprep.subr.mxu0 0.0
          %488 = vmatpush1.msra.mxu0 %v469
          %489 = vmatprep.subr.mxu0 0.0
          %490 = vmatpush1.msra.mxu0 %v470
          %491 = vmatprep.subr.mxu0 0.0
          %492 = vmatpush1.msra.mxu0 %v471
          %493 = vmatprep.subr.mxu0 0.0
          %494 = vmatpush1.msra.mxu0 %v472
          %495 = vmatprep.subr.mxu0 0.0
          %496 = vmatpush1.msra.mxu0 %v473
          %497 = vmatprep.subr.mxu0 0.0
          %498 = vmatpush1.msra.mxu0 %v474
          %499 = vmatprep.subr.mxu0 0.0
          %500 = vmatpush1.msra.mxu0 %v475
          %501 = vmatprep.subr.mxu0 0.0
          %502 = vmatpush1.msra.mxu0 %v476
          %503 = vmatprep.subr.mxu0 0.0
          %504 = vmatpush1.msra.mxu0 %v477
          %505 = vmatprep.subr.mxu0 0.0
          %506 = vmatpush1.msra.mxu0 %v478
          %507 = vmatprep.subr.mxu0 0.0
          %508 = vmatpush1.msra.mxu0 %v479
          %509 = vmatprep.subr.mxu0 0.0
          %510 = vmatpush1.msra.mxu0 %v480
          %511 = vmatprep.subr.mxu0 0.0
          %512 = vmatpush1.msra.mxu0 %v481
          %513 = vmatprep.subr.mxu0 0.0
          %514 = vmatpush1.msra.mxu0 %v482
          %515 = vmatprep.subr.mxu0 0.0
          %516 = vmatpush1.msra.mxu0 0.0
          %517 = vmatprep.subr.mxu0 0.0
          %518 = vmatpush1.msra.mxu0 0.0
          %519 = vmatprep.subr.mxu0 0.0
          %520 = vmatpush1.msra.mxu0 0.0
          %521 = vmatprep.subr.mxu0 0.0
          %522 = vmatpush1.msra.mxu0 0.0
          %523 = vmatprep.subr.mxu0 0.0
          %524 = vmatpush1.msra.mxu0 0.0
          %525 = vmatprep.subr.mxu0 0.0
          %526 = vmatpush1.msra.mxu0 0.0
          %527 = vmatprep.subr.mxu0 0.0
          %528 = vmatpush1.msra.mxu0 0.0
          %529 = vmatprep.subr.mxu0 0.0
          %530 = vmatpush1.msra.mxu0 0.0
          %531 = vmatprep.subr.mxu0 0.0
          %532 = vmatpush1.msra.mxu0 0.0
          %533 = vmatprep.subr.mxu0 0.0
          %534 = vmatpush1.msra.mxu0 0.0
          %535 = vmatprep.subr.mxu0 0.0
          %536 = vmatpush1.msra.mxu0 0.0
          %537 = vmatprep.subr.mxu0 0.0
          %538 = vmatpush1.msra.mxu0 0.0
          %539 = vmatprep.subr.mxu0 0.0
          %540 = vmatpush1.msra.mxu0 0.0
          %541 = vmatprep.subr.mxu0 0.0
          %542 = vmatpush1.msra.mxu0 0.0
          %543 = vmatprep.subr.mxu0 0.0
          %544 = vmatpush1.msra.mxu0 0.0
          %545 = vmatprep.subr.mxu0 0.0
          %546 = vmatpush1.msra.mxu0 0.0
          %547 = vmatprep.mubr.f32.mxu0 0.0
          %548 = vmatmul.mubr.f32.gmra.mrb[0].mxu0 %v466
          %v549 = vpop.f32.mrb[0].mxu0
          %v550 = vadd.f32 0.0, %v549
          %v551 = vpop.f32.mrb[0].mxu0
          %552 = vdwg.mxu0
          %v553 = vmul.f32 %v550, 0.00048828125
          %v555 = vrot.slane %v466, 1
          %557 = vmatprep.subr.mxu0 0.0
          %558 = vmatpush1.msra.mxu0 %v467
          %559 = vmatprep.subr.mxu0 0.0
          %560 = vmatpush1.msra.mxu0 %v468
          %561 = vmatprep.subr.mxu0 0.0
          %562 = vmatpush1.msra.mxu0 %v469
          %563 = vmatprep.subr.mxu0 0.0
          %564 = vmatpush1.msra.mxu0 %v470
          %565 = vmatprep.subr.mxu0 0.0
          %566 = vmatpush1.msra.mxu0 %v471
          %567 = vmatprep.subr.mxu0 0.0
          %568 = vmatpush1.msra.mxu0 %v472
          %569 = vmatprep.subr.mxu0 0.0
          %570 = vmatpush1.msra.mxu0 %v473
          %571 = vmatprep.subr.mxu0 0.0
          %572 = vmatpush1.msra.mxu0 %v474
          %573 = vmatprep.subr.mxu0 0.0
          %574 = vmatpush1.msra.mxu0 %v475
          %575 = vmatprep.subr.mxu0 0.0
          %576 = vmatpush1.msra.mxu0 %v476
          %577 = vmatprep.subr.mxu0 0.0
          %578 = vmatpush1.msra.mxu0 %v477
          %579 = vmatprep.subr.mxu0 0.0
          %580 = vmatpush1.msra.mxu0 %v478
          %581 = vmatprep.subr.mxu0 0.0
          %582 = vmatpush1.msra.mxu0 %v479
          %583 = vmatprep.subr.mxu0 0.0
          %584 = vmatpush1.msra.mxu0 %v480
          %585 = vmatprep.subr.mxu0 0.0
          %586 = vmatpush1.msra.mxu0 %v481
          %587 = vmatprep.subr.mxu0 0.0
          %588 = vmatpush1.msra.mxu0 %v482
          %589 = vmatprep.subr.mxu0 0.0
          %590 = vmatpush1.msra.mxu0 0.0
          %591 = vmatprep.subr.mxu0 0.0
          %592 = vmatpush1.msra.mxu0 0.0
          %593 = vmatprep.subr.mxu0 0.0
          %594 = vmatpush1.msra.mxu0 0.0
          %595 = vmatprep.subr.mxu0 0.0
          %596 = vmatpush1.msra.mxu0 0.0
          %597 = vmatprep.subr.mxu0 0.0
          %598 = vmatpush1.msra.mxu0 0.0
          %599 = vmatprep.subr.mxu0 0.0
          %600 = vmatpush1.msra.mxu0 0.0
          %601 = vmatprep.subr.mxu0 0.0
          %602 = vmatpush1.msra.mxu0 0.0
          %603 = vmatprep.subr.mxu0 0.0
          %604 = vmatpush1.msra.mxu0 0.0
          %605 = vmatprep.subr.mxu0 0.0
          %606 = vmatpush1.msra.mxu0 0.0
          %607 = vmatprep.subr.mxu0 0.0
          %608 = vmatpush1.msra.mxu0 0.0
          %609 = vmatprep.subr.mxu0 0.0
          %610 = vmatpush1.msra.mxu0 0.0
          %611 = vmatprep.subr.mxu0 0.0
          %612 = vmatpush1.msra.mxu0 0.0
          %613 = vmatprep.subr.mxu0 0.0
          %614 = vmatpush1.msra.mxu0 0.0
          %615 = vmatprep.subr.mxu0 0.0
          %616 = vmatpush1.msra.mxu0 0.0
          %617 = vmatprep.subr.mxu0 0.0
          %618 = vmatpush1.msra.mxu0 0.0
          %619 = vmatprep.subr.mxu0 0.0
          %620 = vmatpush1.msra.mxu0 0.0
          %621 = vmatprep.mubr.f32.mxu0 0.0
          %622 = vmatmul.mubr.f32.gmra.mrb[0].mxu0 %v555
          %v623 = vpop.f32.mrb[0].mxu0
          %v624 = vadd.f32 0.0, %v623
          %v625 = vpop.f32.mrb[0].mxu0
          %626 = vdwg.mxu0
          %v627 = vmul.f32 %v624, 0.00048828125
          %v628 = vmul.f32 %v553, %v553
          %v629 = vsub.f32 %v627, %v628
          %v630 = vmax.f32 %v629, 0.0
          %v631 = vadd.f32 %v630, 1e-06
          %v632 = vrsqrt.pop %v631
          %v633 = vld [vmem:[#allocation11] sm:$0xff]
          %v634 = vld [vmem:[#allocation11 + $0x8] sm:$0xff]
          %v635 = vld [vmem:[#allocation11 + $0x10] sm:$0xff]
          %v636 = vld [vmem:[#allocation11 + $0x18] sm:$0xff]
          %vm637 = vcmask 261120
          %v639 = vsel %vm637, %v632, 0
          %641 = vmatprep.subr.mxu0 0.0
          %642 = vmatpush1.msra.mxu0 %v633
          %643 = vmatprep.subr.mxu0 0.0
          %644 = vmatpush1.msra.mxu0 %v634
          %645 = vmatprep.subr.mxu0 0.0
          %646 = vmatpush1.msra.mxu0 %v635
          %647 = vmatprep.subr.mxu0 0.0
          %648 = vmatpush1.msra.mxu0 %v636
          %649 = vmatprep.subr.mxu0 0.0
          %650 = vmatpush1.msra.mxu0 0.0
          %651 = vmatprep.subr.mxu0 0.0
          %652 = vmatpush1.msra.mxu0 0.0
          %653 = vmatprep.subr.mxu0 0.0
          %654 = vmatpush1.msra.mxu0 0.0
          %655 = vmatprep.subr.mxu0 0.0
          %656 = vmatpush1.msra.mxu0 0.0
          %657 = vmatprep.subr.mxu0 0.0
          %658 = vmatpush1.msra.mxu0 0.0
          %659 = vmatprep.subr.mxu0 0.0
          %660 = vmatpush1.msra.mxu0 0.0
          %661 = vmatprep.subr.mxu0 0.0
          %662 = vmatpush1.msra.mxu0 0.0
          %663 = vmatprep.subr.mxu0 0.0
          %664 = vmatpush1.msra.mxu0 0.0
          %665 = vmatprep.subr.mxu0 0.0
          %666 = vmatpush1.msra.mxu0 0.0
          %667 = vmatprep.subr.mxu0 0.0
          %668 = vmatpush1.msra.mxu0 0.0
          %669 = vmatprep.subr.mxu0 0.0
          %670 = vmatpush1.msra.mxu0 0.0
          %671 = vmatprep.subr.mxu0 0.0
          %672 = vmatpush1.msra.mxu0 0.0
          %673 = vmatprep.subr.mxu0 0.0
          %674 = vmatpush1.msra.mxu0 0.0
          %675 = vmatprep.subr.mxu0 0.0
          %676 = vmatpush1.msra.mxu0 0.0
          %677 = vmatprep.subr.mxu0 0.0
          %678 = vmatpush1.msra.mxu0 0.0
          %679 = vmatprep.subr.mxu0 0.0
          %680 = vmatpush1.msra.mxu0 0.0
          %681 = vmatprep.subr.mxu0 0.0
          %682 = vmatpush1.msra.mxu0 0.0
          %683 = vmatprep.subr.mxu0 0.0
          %684 = vmatpush1.msra.mxu0 0.0
          %685 = vmatprep.subr.mxu0 0.0
          %686 = vmatpush1.msra.mxu0 0.0
          %687 = vmatprep.subr.mxu0 0.0
          %688 = vmatpush1.msra.mxu0 0.0
          %689 = vmatprep.subr.mxu0 0.0
          %690 = vmatpush1.msra.mxu0 0.0
          %691 = vmatprep.subr.mxu0 0.0
          %692 = vmatpush1.msra.mxu0 0.0
          %693 = vmatprep.subr.mxu0 0.0
          %694 = vmatpush1.msra.mxu0 0.0
          %695 = vmatprep.subr.mxu0 0.0
          %696 = vmatpush1.msra.mxu0 0.0
          %697 = vmatprep.subr.mxu0 0.0
          %698 = vmatpush1.msra.mxu0 0.0
          %699 = vmatprep.subr.mxu0 0.0
          %700 = vmatpush1.msra.mxu0 0.0
          %701 = vmatprep.subr.mxu0 0.0
          %702 = vmatpush1.msra.mxu0 0.0
          %703 = vmatprep.subr.mxu0 0.0
          %704 = vmatpush1.msra.mxu0 0.0
          %705 = vmatprep.mubr.f32.mxu0 0.0
          %706 = vmatmul.mubr.f32.gmra.mrb[0].mxu0 %v639
          %v707 = vpop.f32.mrb[0].mxu0
          %v708 = vadd.f32 0.0, %v707
          %v709 = vpop.f32.mrb[0].mxu0
          %710 = vdwg.mxu0
          %v712 = vsel %vm637, %v553, 0
          %714 = vmatprep.subr.mxu0 0.0
          %715 = vmatpush1.msra.mxu0 %v633
          %716 = vmatprep.subr.mxu0 0.0
          %717 = vmatpush1.msra.mxu0 %v634
          %718 = vmatprep.subr.mxu0 0.0
          %719 = vmatpush1.msra.mxu0 %v635
          %720 = vmatprep.subr.mxu0 0.0
          %721 = vmatpush1.msra.mxu0 %v636
          %722 = vmatprep.subr.mxu0 0.0
          %723 = vmatpush1.msra.mxu0 0.0
          %724 = vmatprep.subr.mxu0 0.0
          %725 = vmatpush1.msra.mxu0 0.0
          %726 = vmatprep.subr.mxu0 0.0
          %727 = vmatpush1.msra.mxu0 0.0
          %728 = vmatprep.subr.mxu0 0.0
          %729 = vmatpush1.msra.mxu0 0.0
          %730 = vmatprep.subr.mxu0 0.0
          %731 = vmatpush1.msra.mxu0 0.0
          %732 = vmatprep.subr.mxu0 0.0
          %733 = vmatpush1.msra.mxu0 0.0
          %734 = vmatprep.subr.mxu0 0.0
          %735 = vmatpush1.msra.mxu0 0.0
          %736 = vmatprep.subr.mxu0 0.0
          %737 = vmatpush1.msra.mxu0 0.0
          %738 = vmatprep.subr.mxu0 0.0
          %739 = vmatpush1.msra.mxu0 0.0
          %740 = vmatprep.subr.mxu0 0.0
          %741 = vmatpush1.msra.mxu0 0.0
          %742 = vmatprep.subr.mxu0 0.0
          %743 = vmatpush1.msra.mxu0 0.0
          %744 = vmatprep.subr.mxu0 0.0
          %745 = vmatpush1.msra.mxu0 0.0
          %746 = vmatprep.subr.mxu0 0.0
          %747 = vmatpush1.msra.mxu0 0.0
          %748 = vmatprep.subr.mxu0 0.0
          %749 = vmatpush1.msra.mxu0 0.0
          %750 = vmatprep.subr.mxu0 0.0
          %751 = vmatpush1.msra.mxu0 0.0
          %752 = vmatprep.subr.mxu0 0.0
          %753 = vmatpush1.msra.mxu0 0.0
          %754 = vmatprep.subr.mxu0 0.0
          %755 = vmatpush1.msra.mxu0 0.0
          %756 = vmatprep.subr.mxu0 0.0
          %757 = vmatpush1.msra.mxu0 0.0
          %758 = vmatprep.subr.mxu0 0.0
          %759 = vmatpush1.msra.mxu0 0.0
          %760 = vmatprep.subr.mxu0 0.0
          %761 = vmatpush1.msra.mxu0 0.0
          %762 = vmatprep.subr.mxu0 0.0
          %763 = vmatpush1.msra.mxu0 0.0
          %764 = vmatprep.subr.mxu0 0.0
          %765 = vmatpush1.msra.mxu0 0.0
          %766 = vmatprep.subr.mxu0 0.0
          %767 = vmatpush1.msra.mxu0 0.0
          %768 = vmatprep.subr.mxu0 0.0
          %769 = vmatpush1.msra.mxu0 0.0
          %770 = vmatprep.subr.mxu0 0.0
          %771 = vmatpush1.msra.mxu0 0.0
          %772 = vmatprep.subr.mxu0 0.0
          %773 = vmatpush1.msra.mxu0 0.0
          %774 = vmatprep.subr.mxu0 0.0
          %775 = vmatpush1.msra.mxu0 0.0
          %776 = vmatprep.subr.mxu0 0.0
          %777 = vmatpush1.msra.mxu0 0.0
          %778 = vmatprep.mubr.f32.mxu0 0.0
          %779 = vmatmul.mubr.f32.gmra.mrb[0].mxu0 %v712
          %v780 = vpop.f32.mrb[0].mxu0
          %v781 = vadd.f32 0.0, %v780
          %v782 = vpop.f32.mrb[0].mxu0
          %783 = vdwg.mxu0
          %v784 = vld [vmem:[#allocation6] sm:$0x1]
          %v785 = vmul.f32 %v784, %v708
          %v786 = vld [vmem:[#allocation8] sm:$0x1]
          %v787 = vmul.f32 %v781, %v785
          %v788 = vsub.f32 %v786, %v787
          %v790 = vlaneseq
          %v791 = vshrl.u32 %v790, 7
          %v792 = vsub.s32 0, %v791
          %v793 = vrot.slane %v788, %v792
          %v795 = vsel %vm458, %v785, %v793
          %796 = vst [vmem:[%s312] sm:$0x3] %v795
        $region68: #{tpu_custom_call.1} parent=39 // pred_fallthru
          _
        %s797 = sand.u32 %s156, 1
        %s798 = scalar_lea.sflag [#allocation5], %s797
        %s799 = sand.u32 %s156, 1
        %s800 = smul.addr %s799, 2
        %s801 = scalar_lea.vmem [#allocation12], %s800
        // Predicated region
        $region69: #{tpu_custom_call.1} parent=39 // pred_check
          %p802 = pneg %p166
        $region70: #{tpu_custom_call.1} parent=39 // pred_check_branch
          %804 = sbr.rel (%p802) target = $region72
        $region71: #{tpu_custom_call.1} parent=39 // pred_region
          %s806 = ssub.s32 32, 32
          %807 = vsyncadd %s798, %s806
          %s808 = smul.addr %s28, 32
          %s809 = scalar_lea.hbm %s5, %s808
          %s811 = sshll.u32 %s801, 4
          %s812 = int_to_ptr.vmem [resolvable:$true] %s811
          %814 = dma.vmem_to_hbm [thread:$0]  %s812, 32, %s809, %s798
        $region72: #{tpu_custom_call.1} parent=39 // pred_fallthru
          _
      $region40: #{tpu_custom_call.1} parent=5 // pred_fallthru
        _
      %p815 = scmp.le.s32.totalorder 2, %s19
      // Predicated region
      $region73: #{tpu_custom_call.1} parent=5 // pred_check
        %p816 = pneg %p815
      $region74: #{tpu_custom_call.1} parent=5 // pred_check_branch
        %818 = sbr.rel (%p816) target = $region76
      $region75: #{tpu_custom_call.1} parent=5 // pred_region
        %s819 = ssub.s32 %s19, 2
        // Predicated region
        $region77: #{tpu_custom_call.1} parent=75 // pred_check
          %p820 = pneg %p172
        $region78: #{tpu_custom_call.1} parent=75 // pred_check_branch
          %822 = sbr.rel (%p820) target = $region80
        $region79: #{tpu_custom_call.1} parent=75 // pred_region
          %s823 = sand.u32 %s157, 1
          %s824 = scalar_lea.sflag [#allocation5], %s823
          %s825 = sand.u32 %s157, 1
          %s826 = smul.addr %s825, 2
          %s827 = scalar_lea.vmem [#allocation12], %s826
          %828 = dma.done %s824, 32
        $region80: #{tpu_custom_call.1} parent=75 // pred_fallthru
          _
      $region76: #{tpu_custom_call.1} parent=5 // pred_fallthru
        _
    $region6: #{tpu_custom_call.1} parent=1 // loop_footer
      %s23 = sadd.s32 1, %s19
    $region7: #{tpu_custom_call.1} parent=1 // loop_footer_branch
      %18 = sbr.rel target = $region3
    $region8: #{tpu_custom_call.1} parent=1 // loop_exit
      _
    %829 = vsyncpa [#allocation4], 1
    %s830 = scalar_lea.sflag [#allocation4], 1
    %831 = vsyncpa %s830, 1
    %832 = vsyncpa [#allocation7], 1
    %833 = vsyncpa [#allocation10], 1
    %834 = vsyncpa [#allocation5], 1
    %s835 = scalar_lea.sflag [#allocation5], 1
    %836 = vsyncpa %s835, 1

</llo_original>
